<compile_context>
chip_gen: v5e
topology: v5e:2x2
jax: 0.10.0
libtpu: 0.0.40
codegen_flags: <defaults>
</compile_context>

<pallas_src>
import jax
import jax.numpy as jnp
from jax.experimental import pallas as pl
from jax.experimental.pallas import tpu as pltpu


_LANE = 128
_SUB = 32                                # sublane multiple legal for 8/16/32-bit inputs
_TILE_IO_BYTES_TARGET = 4 * 1024 * 1024  # in+out bytes per tile (x2 when double-buffered)
_VMEM_LIMIT_BYTES = 16 * 1024 * 1024     # explicit scoped-VMEM limit; safe on v5e/v6e/v7x
# Below this, a bare XLA convert_element_type (which fuses with the unsqueeze and any
# downstream consumer and is already at HBM roofline) beats a standalone pallas_call.
_MIN_PALLAS_ELEMS = 32 * 1024


def _round_up(x: int, m: int) -> int:
    return (x + m - 1) // m * m


def _to_tensor_mask_kernel(mask_ref, out_ref):
    # Hot path: trivial elementwise dtype cast on the VPU; HBM<->VMEM DMA is handled by the
    # auto-pipeline (double-buffered, overlapping the cast).
    out_ref[...] = mask_ref[...].astype(out_ref.dtype)


def _choose_tiles(H: int, W: int, in_itemsize: int) -> tuple[int, int]:
    """Pick (tile_h, tile_w): ~_TILE_IO_BYTES_TARGET of in+out traffic per tile."""
    io_bytes = in_itemsize + 4  # input element + int32 output element

    # Column tiling: use full-width strips (always layout-legal, no padding copy) unless
    # even a minimal 32-row strip would blow the per-tile budget; then tile W in
    # 128-multiples so the (8,128) rule still holds and only the final block is ragged.
    if W * _SUB * io_bytes <= _TILE_IO_BYTES_TARGET:
        tile_w = W
    else:
        tile_w = max(_LANE, (_TILE_IO_BYTES_TARGET // (_SUB * io_bytes)) // _LANE * _LANE)
        tile_w = min(tile_w, _round_up(W, _LANE))

    # Row tiling: as many sublane-aligned rows as fit the budget (no fixed row cap).
    tile_h = max(_SUB, (_TILE_IO_BYTES_TARGET // (tile_w * io_bytes)) // _SUB * _SUB)
    tile_h = min(tile_h, _round_up(H, _SUB))

    # Megacore: ensure >= 2 grid steps whenever the mask is splittable so v7x can shard
    # tiles across both TensorCores (neutral on single-TC v5e/v6e).
    if pl.cdiv(H, tile_h) * pl.cdiv(W, tile_w) == 1:
        if H > _SUB:
            tile_h = max(_SUB, _round_up(pl.cdiv(H, 2), _SUB))
        elif W > _LANE:
            tile_w = max(_LANE, _round_up(pl.cdiv(W, 2), _LANE))

    return tile_h, tile_w


def _to_tensor_mask_pallas(mask: jax.Array) -> jax.Array:
    """(H, W) mask -> (H, W) int32 via a 2-D-tiled, pipelined Pallas kernel (no pad/slice)."""
    H, W = mask.shape
    in_itemsize = jnp.dtype(mask.dtype).itemsize
    tile_h, tile_w = _choose_tiles(H, W, in_itemsize)

    grid = (pl.cdiv(H, tile_h), pl.cdiv(W, tile_w))

    return pl.pallas_call(
        _to_tensor_mask_kernel,
        out_shape=jax.ShapeDtypeStruct((H, W), jnp.int32),
        grid=grid,
        in_specs=[pl.BlockSpec((tile_h, tile_w), lambda i, j: (i, j))],
        out_specs=pl.BlockSpec((tile_h, tile_w), lambda i, j: (i, j)),
        compiler_params=pltpu.CompilerParams(
            dimension_semantics=("parallel", "parallel"),
            vmem_limit_bytes=_VMEM_LIMIT_BYTES),
    )(mask)


def to_tensor_mask(mask: jax.Array) -> jax.Array:
    """Pallas equivalent of ToTensorMask.forward.

    mask: (H, W) array (any numeric dtype)
    returns: (1, H, W) int32 array
    """
    H, W = mask.shape
    if H * W < _MIN_PALLAS_ELEMS:
        # Small mask: a standalone pallas_call is pure launch overhead; let XLA fuse the cast.
        return mask.astype(jnp.int32)[None, ...]
    casted = _to_tensor_mask_pallas(mask)
    # Glue: unsqueeze(0) done outside the kernel (pure metadata reshape).
    return casted[None, ...]


if __name__ == "__main__":
    key = jax.random.PRNGKey(0)
    k1, k2, k3 = jax.random.split(key, 3)

    # Case 1: tiny uint8 mask (16x16) -> XLA fallback path.
    m1 = jax.random.randint(k1, (16, 16), 0, 21, dtype=jnp.int32).astype(jnp.uint8)
    # Case 2: unaligned uint8 mask (ragged in both H and W) -> Pallas path, no pad / no slice.
    m2 = jax.random.randint(k2, (257, 200), 0, 21, dtype=jnp.int32).astype(jnp.uint8)
    # Case 3: aligned float mask -> Pallas path, lane-dense full-width blocks, 2 row tiles.
    m3 = jax.random.uniform(k3, (256, 384), dtype=jnp.float32, minval=0.0, maxval=5.0)

    for m in (m1, m2, m3):
        out = to_tensor_mask(m)
        jax.block_until_ready(out)

        ref = jnp.expand_dims(m.astype(jnp.int32), 0)
        assert out.shape == (1,) + m.shape, (out.shape, m.shape)
        assert out.dtype == jnp.int32, out.dtype
        assert bool(jnp.all(out == ref)), "mismatch vs reference cast"

    print("KERNEL_OK")
</pallas_src>

<mosaic_0001>
module attributes {stable_mosaic.version = 11 : i64} {
  func.func @_to_tensor_mask_kernel(%arg0: i32, %arg1: i32, %arg2: memref<160x200xi8, #tpu.memory_space<vmem>>, %arg3: memref<160x200xi32, #tpu.memory_space<vmem>>) attributes {dimension_semantics = [#tpu.dimension_semantics<parallel>, #tpu.dimension_semantics<parallel>], iteration_bounds = array<i64: 2, 1>, scalar_prefetch = 0 : i64, scratch_operands = 0 : i64, tpu.core_type = #tpu.core_type<tc>, window_params = [{transform_indices = @transform_0, window_bounds = array<i64: 160, 200>}, {transform_indices = @transform_1, window_bounds = array<i64: 160, 200>}]} {
    %c0 = arith.constant 0 : index
    %c0_0 = arith.constant 0 : index
    %0 = vector.load %arg2[%c0, %c0_0] : memref<160x200xi8, #tpu.memory_space<vmem>>, vector<160x200xi8>
    %1 = arith.extui %0 : vector<160x200xi8> to vector<160x200xi32>
    %c0_1 = arith.constant 0 : index
    %c0_2 = arith.constant 0 : index
    %2 = vector.load %arg3[%c0_1, %c0_2] : memref<160x200xi32, #tpu.memory_space<vmem>>, vector<160x200xi32>
    tpu.vector_store %arg3[%c0_1, %c0_2], %1 {strides = array<i32>} : memref<160x200xi32, #tpu.memory_space<vmem>>, vector<160x200xi32>,
    return
  }
  func.func @transform_0(%arg0: i32, %arg1: i32) -> (i32, i32) {
    %c0_i32 = arith.constant 0 : i32
    return %arg0, %arg1 : i32, i32
  }
  func.func @transform_1(%arg0: i32, %arg1: i32) -> (i32, i32) {
    %c0_i32 = arith.constant 0 : i32
    return %arg0, %arg1 : i32, i32
  }
}

</mosaic_0001>

<llo_original>
// kernel: tpu_custom_call.1
$region0: #{tpu_custom_call.1}
  #allocation0 [shape = 'u32[]', space=smem, size = 0x4, offset = 0x4, fixed_abs, tag = 'smem constant byte address 0x4 - core index']
  #allocation1 [shape = 'u32[72,128]{1,0:T(1,128)}', space=vmem, size = 0x9000, scoped, tag = 'internal scratch']
  %s0 = inlined_call_operand.hbm [shape: u8[257,200], index: 0, kind: input, shape index: {}]
  %s1 = inlined_call_operand.hbm [shape: s32[257,200], index: 1, kind: output, shape index: {}]
  %s2 = sld [smem:[#allocation0]]
  $region41: #{tpu_custom_call.1} parent=0
    _
  %s4 = ssub.s32 1, %s2
  %s5 = scalar_select 0, %s4, %s2
  $region1: #{tpu_custom_call.1} parent=0
    #allocation2 [shape = 'u8[81920]{0}', space=vmem, size = 0x14000, scoped, tag = 'input window, operand 0']
    #allocation3 [shape = 's32[2]{0}', space=sflag, size = 0x8, scoped, tag = 'scoped memory for tpu_custom_call.1']
    #allocation4 [shape = 's32[2]{0}', space=sflag, size = 0x8, scoped, tag = 'scoped memory for tpu_custom_call.1']
    #allocation5 [shape = 'u8[327680]{0}', space=vmem, size = 0x50000, scoped, tag = 'output window, operand 0']
    %6 = vsyncpa [#allocation3], 0
    %s7 = scalar_lea.sflag [#allocation3], 1
    %8 = vsyncpa %s7, 0
    %9 = vsyncpa [#allocation4], 0
    %s10 = scalar_lea.sflag [#allocation4], 1
    %11 = vsyncpa %s10, 0
    loop: start=0, step=1, limit=4
    $region2: #{tpu_custom_call.1} parent=1 // loop_pre_header
      _
    $region3: #{tpu_custom_call.1} parent=1 // loop_header
      %s13 = sphi 0, %s17
      %p14 = scmp.ge.s32.totalorder %s13, 4
      %s20 = sphi 0, %s32
      %s21 = sphi 0, %s28
      %s22 = sphi 0, %s20
      %s23 = sphi 0, %s21
      %s24 = sphi 0, %s22
      %s25 = sphi 0, %s23
      %s37 = sphi 0, %s39
      %s40 = sphi 0, %s37
      %s41 = sphi 0, %s40
      %s57 = sphi 0, %s41
      %s65 = sphi 0, %s67
      %s68 = sphi 0, %s65
      %s69 = sphi 0, %s68
      %s85 = sphi 0, %s69
    $region4: #{tpu_custom_call.1} parent=1 // loop_header_branch
      %16 = sbr.rel (%p14) target = $region8
    $region5: #{tpu_custom_call.1} parent=1 // loop_body
      %s18 = ssub.s32 %s13, 1
      %s19 = ssub.s32 %s13, 2
      %s26 = sadd.s32 1, %s21
      %p27 = scmp.ge.s32.totalorder %s26, 1
      %s28 = scalar_select %p27, 0, %s26
      %s29 = sadd.s32 1, %s20
      %s30 = scalar_select %p27, %s29, %s20
      %p31 = scmp.ge.s32.totalorder %s30, 2
      %s32 = scalar_select %p31, 0, %s30
      %s33 = ssub.s32 %s20, %s32
      %s34 = ssub.s32 %s21, %s28
      %s35 = sor.u32 %s33, %s34
      %p36 = scmp.eq.s32.totalorder %s35, 0
      %s38 = sadd.s32 %s37, 1
      %s39 = scalar_select %p36, %s37, %s38
      %p42 = pneg %p36
      %p43 = scmp.eq.s32.totalorder %s13, 1
      %p44 = por %p42, %p43
      %p45 = scmp.ne.s32.totalorder %s37, %s40
      %p46 = scmp.eq.s32.totalorder %s13, 0
      %p47 = por %p45, %p46
      %p48 = scmp.ne.s32.totalorder %s37, %s40
      %p49 = scmp.eq.s32.totalorder %s18, 1
      %p50 = por %p48, %p49
      %p51 = scmp.ne.s32.totalorder %s40, %s41
      %p52 = scmp.eq.s32.totalorder %s18, 0
      %p53 = por %p51, %p52
      %p54 = scmp.ne.s32.totalorder %s40, %s41
      %p55 = scmp.eq.s32.totalorder %s19, 1
      %p56 = por %p54, %p55
      %p58 = scmp.ne.s32.totalorder %s41, %s57
      %p59 = scmp.eq.s32.totalorder %s19, 0
      %p60 = por %p58, %p59
      %s61 = ssub.s32 %s20, %s32
      %s62 = ssub.s32 %s21, %s28
      %s63 = sor.u32 %s61, %s62
      %p64 = scmp.eq.s32.totalorder %s63, 0
      %s66 = sadd.s32 %s65, 1
      %s67 = scalar_select %p64, %s65, %s66
      %p70 = pneg %p64
      %p71 = scmp.eq.s32.totalorder %s13, 1
      %p72 = por %p70, %p71
      %p73 = scmp.ne.s32.totalorder %s65, %s68
      %p74 = scmp.eq.s32.totalorder %s13, 0
      %p75 = por %p73, %p74
      %p76 = scmp.ne.s32.totalorder %s65, %s68
      %p77 = scmp.eq.s32.totalorder %s18, 1
      %p78 = por %p76, %p77
      %p79 = scmp.ne.s32.totalorder %s68, %s69
      %p80 = scmp.eq.s32.totalorder %s18, 0
      %p81 = por %p79, %p80
      %p82 = scmp.ne.s32.totalorder %s68, %s69
      %p83 = scmp.eq.s32.totalorder %s19, 1
      %p84 = por %p82, %p83
      %p86 = scmp.ne.s32.totalorder %s69, %s85
      %p87 = scmp.eq.s32.totalorder %s19, 0
      %p88 = por %p86, %p87
      %p89 = scmp.le.s32.totalorder 1, %s13
      %p90 = scmp.lt.s32.totalorder %s13, 3
      %p91 = pnand %p89, %p90
      %p92 = pneg %p91
      // Predicated region
      $region9: #{tpu_custom_call.1} parent=5 // pred_check
        _
      $region10: #{tpu_custom_call.1} parent=5 // pred_check_branch
        %94 = sbr.rel (%p91) target = $region12
      $region11: #{tpu_custom_call.1} parent=5 // pred_region
        %s95 = ssub.s32 %s13, 1
      $region12: #{tpu_custom_call.1} parent=5 // pred_fallthru
        _
      %p96 = scmp.lt.s32.totalorder %s13, 2
      // Predicated region
      $region13: #{tpu_custom_call.1} parent=5 // pred_check
        %p97 = pneg %p96
      $region14: #{tpu_custom_call.1} parent=5 // pred_check_branch
        %99 = sbr.rel (%p97) target = $region16
      $region15: #{tpu_custom_call.1} parent=5 // pred_region
        // Predicated region
        $region17: #{tpu_custom_call.1} parent=15 // pred_check
          %p100 = pneg %p47
        $region18: #{tpu_custom_call.1} parent=15 // pred_check_branch
          %102 = sbr.rel (%p100) target = $region20
        $region19: #{tpu_custom_call.1} parent=15 // pred_region
          %s103 = sand.u32 %s37, 1
          %s104 = scalar_lea.sflag [#allocation3], %s103
          %s105 = sand.u32 %s37, 1
          %s106 = smul.addr %s105, 80
          %s107 = scalar_lea.vmem [#allocation2], %s106
          %s108 = smul.u32 20, %s20
          %s109 = smul.u32 2, %s21
          %s110 = ssub.s32 33, %s108
          %p111 = scmp.lt.s32.totalorder %s110, 20
          %s112 = scalar_select %p111, %s110, 20
          %s113 = smul.u32 2, %s112
          %s114 = smul.u32 %s113, 2
          %s115 = ssub.s32 80, %s114
          %s116 = sshll.u32 %s115, 4
          %117 = vsyncadd %s104, %s116
          %p118 = scmp.ne.s32.totalorder 0, %s114
          %s119 = smul.addr %s108, 2
          %s120 = sadd.s32 %s109, %s119
          %s121 = smul.addr %s120, 2
          %s122 = scalar_lea.hbm %s0, %s121
          %s123 = smul.u32 4, %s112
          %s124 = sshll.u32 %s122, 4
          %s125 = int_to_ptr.hbm [resolvable:$true] %s124
          %s126 = sshll.u32 %s107, 4
          %s127 = int_to_ptr.vmem [resolvable:$true] %s126
          %s128 = sshll.u32 %s123, 4
          %132 = dma.hbm_to_vmem [thread:$0]  (%p118), %s125, %s128, %s127, %s104, 64, 64, 4
        $region20: #{tpu_custom_call.1} parent=15 // pred_fallthru
          _
      $region16: #{tpu_custom_call.1} parent=5 // pred_fallthru
        _
      %p133 = scmp.le.s32.totalorder 1, %s13
      %p134 = scmp.lt.s32.totalorder %s13, 3
      %p135 = pnand %p133, %p134
      %p136 = pneg %p135
      // Predicated region
      $region21: #{tpu_custom_call.1} parent=5 // pred_check
        _
      $region22: #{tpu_custom_call.1} parent=5 // pred_check_branch
        %138 = sbr.rel (%p135) target = $region24
      $region23: #{tpu_custom_call.1} parent=5 // pred_region
        %s139 = ssub.s32 %s13, 1
        %s140 = sand.u32 %s40, 1
        %s141 = scalar_lea.sflag [#allocation3], %s140
        %s142 = sand.u32 %s40, 1
        %s143 = smul.addr %s142, 80
        %s144 = scalar_lea.vmem [#allocation2], %s143
        // Predicated region
        $region25: #{tpu_custom_call.1} parent=23 // pred_check
          %p145 = pneg %p53
        $region26: #{tpu_custom_call.1} parent=23 // pred_check_branch
          %147 = sbr.rel (%p145) target = $region28
        $region27: #{tpu_custom_call.1} parent=23 // pred_region
          %149 = dma.done %s141, 1280
        $region28: #{tpu_custom_call.1} parent=23 // pred_fallthru
          _
        %s150 = sand.u32 %s40, 1
        %s151 = scalar_lea.sflag [#allocation3], %s150
        %s152 = sand.u32 %s40, 1
        %s153 = smul.addr %s152, 80
        %s154 = scalar_lea.vmem [#allocation2], %s153
        %p155 = pneg %p53
        %p156 = pneg %p50
        %p157 = pneg %p81
        %p158 = pneg %p78
        %s159 = sand.u32 %s68, 1
        %s160 = scalar_lea.sflag [#allocation4], %s159
        %s161 = sand.u32 %s68, 1
        %s162 = smul.addr %s161, 320
        %s163 = scalar_lea.vmem [#allocation5], %s162
        %s164 = smul.u32 20, %s22
        %s165 = smul.u32 2, %s23
        %s166 = ssub.s32 33, %s164
        %p167 = scmp.lt.s32.totalorder %s166, 20
        %s168 = scalar_select %p167, %s166, 20
        %s169 = smul.u32 2, %s168
        %s170 = smul.u32 %s169, 2
        %s171 = smul.u32 20, %s22
        %s172 = smul.u32 2, %s23
        %s173 = ssub.s32 33, %s171
        %p174 = scmp.lt.s32.totalorder %s173, 20
        %s175 = scalar_select %p174, %s173, 20
        %s176 = smul.u32 8, %s175
        %s177 = smul.u32 %s176, 2
        %v178 = vld [vmem:[%s144] sm:$0xf]
        %v179 = vld [vmem:[%s144 + $0x4] sm:$0xf]
        %v180 = vld [vmem:[%s144 + $0x8] sm:$0xf]
        %v181 = vld [vmem:[%s144 + $0xc] sm:$0xf]
        %v182 = vld [vmem:[%s144 + $0x10] sm:$0xf]
        %v183 = vld [vmem:[%s144 + $0x14] sm:$0xf]
        %v184 = vld [vmem:[%s144 + $0x18] sm:$0xf]
        %v185 = vld [vmem:[%s144 + $0x1c] sm:$0xf]
        %v186 = vld [vmem:[%s144 + $0x20] sm:$0xf]
        %v187 = vld [vmem:[%s144 + $0x24] sm:$0xf]
        %v188 = vld [vmem:[%s144 + $0x28] sm:$0xf]
        %v189 = vld [vmem:[%s144 + $0x2c] sm:$0xf]
        %v190 = vld [vmem:[%s144 + $0x30] sm:$0xf]
        %v191 = vld [vmem:[%s144 + $0x34] sm:$0xf]
        %v192 = vld [vmem:[%s144 + $0x38] sm:$0xf]
        %v193 = vld [vmem:[%s144 + $0x3c] sm:$0xf]
        %v194 = vld [vmem:[%s144 + $0x40] sm:$0xf]
        %v195 = vld [vmem:[%s144 + $0x44] sm:$0xf]
        %v196 = vld [vmem:[%s144 + $0x48] sm:$0xf]
        %v197 = vld [vmem:[%s144 + $0x4c] sm:$0xf]
        %v198 = vunpack.c.0.s8 %v178
        %v199 = vunpack.c.1.s8 %v178
        %v200 = vunpack.c.0.s8 %v179
        %v201 = vunpack.c.1.s8 %v179
        %v202 = vunpack.c.0.s8 %v180
        %v203 = vunpack.c.1.s8 %v180
        %v204 = vunpack.c.0.s8 %v181
        %v205 = vunpack.c.1.s8 %v181
        %v206 = vunpack.c.0.s8 %v182
        %v207 = vunpack.c.1.s8 %v182
        %v208 = vunpack.c.0.s8 %v183
        %v209 = vunpack.c.1.s8 %v183
        %v210 = vunpack.c.0.s8 %v184
        %v211 = vunpack.c.1.s8 %v184
        %v212 = vunpack.c.0.s8 %v185
        %v213 = vunpack.c.1.s8 %v185
        %v214 = vunpack.c.0.s8 %v186
        %v215 = vunpack.c.1.s8 %v186
        %v216 = vunpack.c.0.s8 %v187
        %v217 = vunpack.c.1.s8 %v187
        %v218 = vunpack.c.0.s8 %v188
        %v219 = vunpack.c.1.s8 %v188
        %v220 = vunpack.c.0.s8 %v189
        %v221 = vunpack.c.1.s8 %v189
        %v222 = vunpack.c.0.s8 %v190
        %v223 = vunpack.c.1.s8 %v190
        %v224 = vunpack.c.0.s8 %v191
        %v225 = vunpack.c.1.s8 %v191
        %v226 = vunpack.c.0.s8 %v192
        %v227 = vunpack.c.1.s8 %v192
        %v228 = vunpack.c.0.s8 %v193
        %v229 = vunpack.c.1.s8 %v193
        %v230 = vunpack.c.0.s8 %v194
        %v231 = vunpack.c.1.s8 %v194
        %v232 = vunpack.c.0.s8 %v195
        %v233 = vunpack.c.1.s8 %v195
        %v234 = vunpack.c.0.s8 %v196
        %v235 = vunpack.c.1.s8 %v196
        %v236 = vunpack.c.0.s8 %v197
        %v237 = vunpack.c.1.s8 %v197
        %v238 = vand.u32 %v198, 255
        %v239 = vand.u32 %v199, 255
        %v240 = vand.u32 %v200, 255
        %v241 = vand.u32 %v201, 255
        %v242 = vand.u32 %v202, 255
        %v243 = vand.u32 %v203, 255
        %v244 = vand.u32 %v204, 255
        %v245 = vand.u32 %v205, 255
        %v246 = vand.u32 %v206, 255
        %v247 = vand.u32 %v207, 255
        %v248 = vand.u32 %v208, 255
        %v249 = vand.u32 %v209, 255
        %v250 = vand.u32 %v210, 255
        %v251 = vand.u32 %v211, 255
        %v252 = vand.u32 %v212, 255
        %v253 = vand.u32 %v213, 255
        %v254 = vand.u32 %v214, 255
        %v255 = vand.u32 %v215, 255
        %v256 = vand.u32 %v216, 255
        %v257 = vand.u32 %v217, 255
        %v258 = vand.u32 %v218, 255
        %v259 = vand.u32 %v219, 255
        %v260 = vand.u32 %v220, 255
        %v261 = vand.u32 %v221, 255
        %v262 = vand.u32 %v222, 255
        %v263 = vand.u32 %v223, 255
        %v264 = vand.u32 %v224, 255
        %v265 = vand.u32 %v225, 255
        %v266 = vand.u32 %v226, 255
        %v267 = vand.u32 %v227, 255
        %v268 = vand.u32 %v228, 255
        %v269 = vand.u32 %v229, 255
        %v270 = vand.u32 %v230, 255
        %v271 = vand.u32 %v231, 255
        %v272 = vand.u32 %v232, 255
        %v273 = vand.u32 %v233, 255
        %v274 = vand.u32 %v234, 255
        %v275 = vand.u32 %v235, 255
        %v276 = vand.u32 %v236, 255
        %v277 = vand.u32 %v237, 255
        %278 = vst [vmem:[%s163] sm:$0xff] %v238
        %vm279 = vcmask 588800
        %280 = vst.msk [vmem:[%s163 + $0x8] sm:$0xff] %vm279, %v239
        %281 = vst [vmem:[%s163 + $0x10] sm:$0xff] %v240
        %282 = vst.msk [vmem:[%s163 + $0x18] sm:$0xff] %vm279, %v241
        %283 = vst [vmem:[%s163 + $0x20] sm:$0xff] %v242
        %284 = vst.msk [vmem:[%s163 + $0x28] sm:$0xff] %vm279, %v243
        %285 = vst [vmem:[%s163 + $0x30] sm:$0xff] %v244
        %286 = vst.msk [vmem:[%s163 + $0x38] sm:$0xff] %vm279, %v245
        %287 = vst [vmem:[%s163 + $0x40] sm:$0xff] %v246
        %288 = vst.msk [vmem:[%s163 + $0x48] sm:$0xff] %vm279, %v247
        %289 = vst [vmem:[%s163 + $0x50] sm:$0xff] %v248
        %290 = vst.msk [vmem:[%s163 + $0x58] sm:$0xff] %vm279, %v249
        %291 = vst [vmem:[%s163 + $0x60] sm:$0xff] %v250
        %292 = vst.msk [vmem:[%s163 + $0x68] sm:$0xff] %vm279, %v251
        %293 = vst [vmem:[%s163 + $0x70] sm:$0xff] %v252
        %294 = vst.msk [vmem:[%s163 + $0x78] sm:$0xff] %vm279, %v253
        %295 = vst [vmem:[%s163 + $0x80] sm:$0xff] %v254
        %296 = vst.msk [vmem:[%s163 + $0x88] sm:$0xff] %vm279, %v255
        %297 = vst [vmem:[%s163 + $0x90] sm:$0xff] %v256
        %298 = vst.msk [vmem:[%s163 + $0x98] sm:$0xff] %vm279, %v257
        %299 = vst [vmem:[%s163 + $0xa0] sm:$0xff] %v258
        %300 = vst.msk [vmem:[%s163 + $0xa8] sm:$0xff] %vm279, %v259
        %301 = vst [vmem:[%s163 + $0xb0] sm:$0xff] %v260
        %302 = vst.msk [vmem:[%s163 + $0xb8] sm:$0xff] %vm279, %v261
        %303 = vst [vmem:[%s163 + $0xc0] sm:$0xff] %v262
        %304 = vst.msk [vmem:[%s163 + $0xc8] sm:$0xff] %vm279, %v263
        %305 = vst [vmem:[%s163 + $0xd0] sm:$0xff] %v264
        %306 = vst.msk [vmem:[%s163 + $0xd8] sm:$0xff] %vm279, %v265
        %307 = vst [vmem:[%s163 + $0xe0] sm:$0xff] %v266
        %308 = vst.msk [vmem:[%s163 + $0xe8] sm:$0xff] %vm279, %v267
        %309 = vst [vmem:[%s163 + $0xf0] sm:$0xff] %v268
        %310 = vst.msk [vmem:[%s163 + $0xf8] sm:$0xff] %vm279, %v269
        %311 = vst [vmem:[%s163 + $0x100] sm:$0xff] %v270
        %312 = vst.msk [vmem:[%s163 + $0x108] sm:$0xff] %vm279, %v271
        %313 = vst [vmem:[%s163 + $0x110] sm:$0xff] %v272
        %314 = vst.msk [vmem:[%s163 + $0x118] sm:$0xff] %vm279, %v273
        %315 = vst [vmem:[%s163 + $0x120] sm:$0xff] %v274
        %316 = vst.msk [vmem:[%s163 + $0x128] sm:$0xff] %vm279, %v275
        %317 = vst [vmem:[%s163 + $0x130] sm:$0xff] %v276
        %318 = vst.msk [vmem:[%s163 + $0x138] sm:$0xff] %vm279, %v277
        %s319 = sand.u32 %s68, 1
        %s320 = scalar_lea.sflag [#allocation4], %s319
        %s321 = sand.u32 %s68, 1
        %s322 = smul.addr %s321, 320
        %s323 = scalar_lea.vmem [#allocation5], %s322
        // Predicated region
        $region29: #{tpu_custom_call.1} parent=23 // pred_check
          %p324 = pneg %p78
        $region30: #{tpu_custom_call.1} parent=23 // pred_check_branch
          %326 = sbr.rel (%p324) target = $region32
        $region31: #{tpu_custom_call.1} parent=23 // pred_region
          %s327 = smul.u32 20, %s22
          %s328 = smul.u32 2, %s23
          %s329 = ssub.s32 33, %s327
          %p330 = scmp.lt.s32.totalorder %s329, 20
          %s331 = scalar_select %p330, %s329, 20
          %s332 = smul.u32 8, %s331
          %s333 = smul.u32 %s332, 2
          %s334 = ssub.s32 320, %s333
          %s335 = sshll.u32 %s334, 4
          %336 = vsyncadd %s320, %s335
          %p337 = scmp.ne.s32.totalorder 0, %s333
          %s338 = smul.addr %s327, 2
          %s339 = sadd.s32 %s328, %s338
          %s340 = smul.addr %s339, 8
          %s341 = scalar_lea.hbm %s1, %s340
          %s342 = smul.u32 16, %s331
          %s343 = sshll.u32 %s323, 4
          %s344 = int_to_ptr.vmem [resolvable:$true] %s343
          %s345 = sshll.u32 %s341, 4
          %s346 = int_to_ptr.hbm [resolvable:$true] %s345
          %s347 = sshll.u32 %s342, 4
          %351 = dma.vmem_to_hbm [thread:$0]  (%p337), %s344, %s347, %s346, %s320, 256, 256, 16
        $region32: #{tpu_custom_call.1} parent=23 // pred_fallthru
          _
      $region24: #{tpu_custom_call.1} parent=5 // pred_fallthru
        _
      %p352 = scmp.le.s32.totalorder 2, %s13
      // Predicated region
      $region33: #{tpu_custom_call.1} parent=5 // pred_check
        %p353 = pneg %p352
      $region34: #{tpu_custom_call.1} parent=5 // pred_check_branch
        %355 = sbr.rel (%p353) target = $region36
      $region35: #{tpu_custom_call.1} parent=5 // pred_region
        %s356 = ssub.s32 %s13, 2
        // Predicated region
        $region37: #{tpu_custom_call.1} parent=35 // pred_check
          %p357 = pneg %p84
        $region38: #{tpu_custom_call.1} parent=35 // pred_check_branch
          %359 = sbr.rel (%p357) target = $region40
        $region39: #{tpu_custom_call.1} parent=35 // pred_region
          %s360 = sand.u32 %s69, 1
          %s361 = scalar_lea.sflag [#allocation4], %s360
          %s362 = sand.u32 %s69, 1
          %s363 = smul.addr %s362, 320
          %s364 = scalar_lea.vmem [#allocation5], %s363
          %366 = dma.done %s361, 5120
        $region40: #{tpu_custom_call.1} parent=35 // pred_fallthru
          _
      $region36: #{tpu_custom_call.1} parent=5 // pred_fallthru
        _
    $region6: #{tpu_custom_call.1} parent=1 // loop_footer
      %s17 = sadd.s32 1, %s13
    $region7: #{tpu_custom_call.1} parent=1 // loop_footer_branch
      %12 = sbr.rel target = $region3
    $region8: #{tpu_custom_call.1} parent=1 // loop_exit
      _
    %367 = vsyncpa [#allocation3], 1
    %s368 = scalar_lea.sflag [#allocation3], 1
    %369 = vsyncpa %s368, 1
    %370 = vsyncpa [#allocation4], 1
    %s371 = scalar_lea.sflag [#allocation4], 1
    %372 = vsyncpa %s371, 1

</llo_original>
